<compile_context>
chip_gen: v6e
topology: v6e:2x2x1
jax: 0.10.0
libtpu: 0.0.40
codegen_flags: <defaults>
</compile_context>

<pallas_src>
import functools

import jax
import jax.numpy as jnp
from jax.experimental import pallas as pl
from jax.experimental.pallas import tpu as pltpu

EPS = 1e-6
LANE = 128
SUBLANE = 8


def _char_sum_kernel(pred_ref, target_ref, out_ref, *,
                     row_tile, strip, num_tiles, valid_rows_last):
    """Accumulates sum(sqrt((pred-target)^2 + EPS)) into a (8,128) partial."""
    i = pl.program_id(0)

    @pl.when(i == 0)
    def _():
        out_ref[...] = jnp.zeros_like(out_ref)

    n_strips = row_tile // strip

    def accumulate(mask_rows):
        # mask_rows: None for full tiles, static int (#valid rows) on the
        # ragged boundary tile.  Streaming per-strip keeps live intermediates
        # to a few dozen vregs (no (row_tile,128) f32 temporary in VMEM).
        def body(s, acc):
            r0 = pl.multiple_of(s * strip, strip)
            p = pred_ref[pl.ds(r0, strip), :].astype(jnp.float32)
            t = target_ref[pl.ds(r0, strip), :].astype(jnp.float32)
            d = p - t
            e = jnp.sqrt(d * d + EPS)
            if mask_rows is not None:
                # Boundary block: rows >= mask_rows hold undefined VMEM data
                # (partial DMA). Select (not multiply) so NaN/Inf can't leak.
                rid = r0 + jax.lax.broadcasted_iota(jnp.int32, (strip, LANE), 0)
                e = jnp.where(rid < mask_rows, e, 0.0)
            # (strip,128) -> (strip//8, 8, 128), reduce over the major axis:
            # pure vreg-wise VPU adds, no cross-lane XLU work in the loop.
            return acc + e.reshape(strip // SUBLANE, SUBLANE, LANE).sum(axis=0)

        acc = jax.lax.fori_loop(0, n_strips, body,
                                jnp.zeros((SUBLANE, LANE), jnp.float32))
        out_ref[...] += acc

    if valid_rows_last != row_tile:      # static: rows % row_tile != 0
        @pl.when(i < num_tiles - 1)
        def _():
            accumulate(None)

        @pl.when(i == num_tiles - 1)
        def _():
            accumulate(valid_rows_last)
    else:
        accumulate(None)


def char_loss(pred, target, *, row_tile=4096, vmem_limit_bytes=None):
    assert pred.shape == target.shape
    n_elems = int(pred.size)

    pred_flat = pred.reshape(-1)
    target_flat = target.reshape(-1)

    rows = n_elems // LANE               # full 128-wide rows
    rem = n_elems % LANE                 # ragged lane tail (< 128 elems)
    use_kernel = rows >= SUBLANE         # tiny inputs: plain jnp is enough

    total = jnp.zeros((), jnp.float32)
    kernel_elems = 0

    if use_kernel:
        kernel_elems = rows * LANE

        # Zero-copy reshape when n % 128 == 0 (common case).  Only when a
        # lane remainder exists do we slice the prefix (rare).
        if rem:
            main_pred = jax.lax.slice(pred_flat, (0,), (kernel_elems,))
            main_target = jax.lax.slice(target_flat, (0,), (kernel_elems,))
        else:
            main_pred, main_target = pred_flat, target_flat
        pred2d = main_pred.reshape(rows, LANE)
        target2d = main_target.reshape(rows, LANE)

        # Row tile: multiple of the sublane count, never larger than the
        # array (ragged boundary handled by a partial block + mask).
        rt = max(SUBLANE, min(int(row_tile), (rows // SUBLANE) * SUBLANE))
        rt = (rt // SUBLANE) * SUBLANE
        num_tiles = pl.cdiv(rows, rt)
        valid_rows_last = rows - (num_tiles - 1) * rt

        # In-kernel strip size (rows per inner-loop iteration).
        strip = next(c for c in (256, 128, 64, 32, 16, 8) if rt % c == 0)

        kernel = functools.partial(
            _char_sum_kernel,
            row_tile=rt, strip=strip,
            num_tiles=int(num_tiles), valid_rows_last=int(valid_rows_last))

        itemsize = jnp.dtype(pred.dtype).itemsize
        cost = pl.CostEstimate(
            flops=3 * kernel_elems,
            transcendentals=kernel_elems,
            bytes_accessed=2 * kernel_elems * itemsize + SUBLANE * LANE * 4)

        compiler_params = pltpu.CompilerParams(
            dimension_semantics=("arbitrary",),
            vmem_limit_bytes=vmem_limit_bytes)

        partials = pl.pallas_call(
            kernel,
            out_shape=jax.ShapeDtypeStruct((SUBLANE, LANE), jnp.float32),
            grid_spec=pltpu.PrefetchScalarGridSpec(
                num_scalar_prefetch=0,
                grid=(num_tiles,),
                in_specs=[
                    pl.BlockSpec((rt, LANE), lambda i: (i, 0)),
                    pl.BlockSpec((rt, LANE), lambda i: (i, 0)),
                ],
                out_specs=pl.BlockSpec((SUBLANE, LANE), lambda i: (0, 0)),
            ),
            compiler_params=compiler_params,
            cost_estimate=cost,
        )(pred2d, target2d)

        # Single tiny cross-lane reduce in the epilogue (outside the kernel).
        total = jnp.sum(partials, dtype=jnp.float32)

    if kernel_elems < n_elems:
        # < 128-element lane tail (or the whole tensor if it is tiny).
        tp = pred_flat[kernel_elems:].astype(jnp.float32)
        tt = target_flat[kernel_elems:].astype(jnp.float32)
        d = tp - tt
        total = total + jnp.sum(jnp.sqrt(d * d + EPS), dtype=jnp.float32)

    return total / n_elems


if __name__ == "__main__":
    key = jax.random.PRNGKey(0)
    k1, k2 = jax.random.split(key)

    char_loss_jit = jax.jit(char_loss)

    # NCHW, as in PyTorch conv-style tensors (n % 128 == 0 -> zero-copy path).
    pred = jax.random.normal(k1, (2, 4, 16, 16), dtype=jnp.float32)
    target = jax.random.normal(k2, (2, 4, 16, 16), dtype=jnp.float32)
    loss = jax.block_until_ready(char_loss_jit(pred, target))
    diff = pred - target
    ref = jnp.mean(jnp.sqrt(diff * diff + EPS))
    assert jnp.allclose(loss, ref, atol=1e-5, rtol=1e-5), (loss, ref)

    # Ragged case: exercises the boundary-block mask and the lane tail.
    k3, k4 = jax.random.split(k2)
    pred_r = jax.random.normal(k3, (3, 5, 7, 11), dtype=jnp.float32)   # 1155
    target_r = jax.random.normal(k4, (3, 5, 7, 11), dtype=jnp.float32)
    loss_r = jax.block_until_ready(char_loss_jit(pred_r, target_r))
    diff_r = pred_r - target_r
    ref_r = jnp.mean(jnp.sqrt(diff_r * diff_r + EPS))
    assert jnp.allclose(loss_r, ref_r, atol=1e-5, rtol=1e-5), (loss_r, ref_r)

    print("KERNEL_OK")
</pallas_src>

<mosaic_0001>
module attributes {stable_mosaic.version = 11 : i64} {
  func.func @_char_sum_kernel(%arg0: i32, %arg1: memref<16x128xf32, #tpu.memory_space<vmem>>, %arg2: memref<16x128xf32, #tpu.memory_space<vmem>>, %arg3: memref<8x128xf32, #tpu.memory_space<vmem>>) attributes {dimension_semantics = [#tpu.dimension_semantics<arbitrary>], iteration_bounds = array<i64: 1>, scalar_prefetch = 0 : i64, scratch_operands = 0 : i64, tpu.core_type = #tpu.core_type<tc>, window_params = [{transform_indices = @transform_0, window_bounds = array<i64: 16, 128>}, {transform_indices = @transform_1, window_bounds = array<i64: 16, 128>}, {pipeline_mode = #tpu.pipeline_mode<synchronous>, transform_indices = @transform_2, window_bounds = array<i64: 8, 128>}]} {
    %c0_i32 = arith.constant 0 : i32
    %0 = arith.cmpi eq, %arg0, %c0_i32 : i32
    %1 = arith.extui %0 : i1 to i32
    %c0_i32_0 = arith.constant 0 : i32
    %2 = arith.cmpi ne, %1, %c0_i32_0 : i32
    scf.if %2 {
      %cst_9 = arith.constant 0.000000e+00 : f32
      %21 = vector.broadcast %cst_9 : f32 to vector<8x128xf32>
      %c0_10 = arith.constant 0 : index
      %c0_11 = arith.constant 0 : index
      %22 = vector.load %arg3[%c0_10, %c0_11] : memref<8x128xf32, #tpu.memory_space<vmem>>, vector<8x128xf32>
      tpu.vector_store %arg3[%c0_10, %c0_11], %21 {strides = array<i32>} : memref<8x128xf32, #tpu.memory_space<vmem>>, vector<8x128xf32>,
    } else {
    }
    %cst = arith.constant 0.000000e+00 : f32
    %3 = vector.broadcast %cst : f32 to vector<8x128xf32>
    %c0_i32_1 = arith.constant 0 : i32
    %c16_i32 = arith.constant 16 : i32
    %4 = arith.muli %c0_i32_1, %c16_i32 : i32
    %5 = tpu.assume_multiple %4, 16 : i32
    %6 = arith.index_cast %5 : i32 to index
    %c0 = arith.constant 0 : index
    %7 = vector.load %arg1[%6, %c0] : memref<16x128xf32, #tpu.memory_space<vmem>>, vector<16x128xf32>
    %8 = arith.index_cast %5 : i32 to index
    %c0_2 = arith.constant 0 : index
    %9 = vector.load %arg2[%8, %c0_2] : memref<16x128xf32, #tpu.memory_space<vmem>>, vector<16x128xf32>
    %10 = arith.subf %7, %9 : vector<16x128xf32>
    %11 = arith.mulf %10, %10 : vector<16x128xf32>
    %cst_3 = arith.constant 9.99999997E-7 : f32
    %12 = vector.broadcast %cst_3 : f32 to vector<16x128xf32>
    %13 = arith.addf %11, %12 : vector<16x128xf32>
    %14 = math.sqrt %13 : vector<16x128xf32>
    %15 = vector.shape_cast %14 : vector<16x128xf32> to vector<2x8x128xf32>
    %cst_4 = arith.constant dense<0.000000e+00> : vector<8x128xf32>
    %16 = vector.multi_reduction <add>, %15, %cst_4 [0] : vector<2x8x128xf32> to vector<8x128xf32>
    %17 = arith.addf %3, %16 : vector<8x128xf32>
    %c1_i32 = arith.constant 1 : i32
    %c0_5 = arith.constant 0 : index
    %c0_6 = arith.constant 0 : index
    %18 = vector.load %arg3[%c0_5, %c0_6] : memref<8x128xf32, #tpu.memory_space<vmem>>, vector<8x128xf32>
    %19 = arith.addf %18, %17 : vector<8x128xf32>
    %c0_7 = arith.constant 0 : index
    %c0_8 = arith.constant 0 : index
    %20 = vector.load %arg3[%c0_7, %c0_8] : memref<8x128xf32, #tpu.memory_space<vmem>>, vector<8x128xf32>
    tpu.vector_store %arg3[%c0_7, %c0_8], %19 {strides = array<i32>} : memref<8x128xf32, #tpu.memory_space<vmem>>, vector<8x128xf32>,
    return
  }
  func.func @transform_0(%arg0: i32) -> (i32, i32) {
    %c0_i32 = arith.constant 0 : i32
    %c0_i32_0 = arith.constant 0 : i32
    return %arg0, %c0_i32 : i32, i32
  }
  func.func @transform_1(%arg0: i32) -> (i32, i32) {
    %c0_i32 = arith.constant 0 : i32
    %c0_i32_0 = arith.constant 0 : i32
    return %arg0, %c0_i32 : i32, i32
  }
  func.func @transform_2(%arg0: i32) -> (i32, i32) {
    %c0_i32 = arith.constant 0 : i32
    %c0_i32_0 = arith.constant 0 : i32
    %c0_i32_1 = arith.constant 0 : i32
    return %c0_i32, %c0_i32_0 : i32, i32
  }
}

</mosaic_0001>

<llo_original>
// kernel: char_loss.1
$region0: #{char_loss.1}
  #allocation0 [shape = 'u32[]', space=smem, size = 0x4, offset = 0x4, fixed_abs, tag = 'smem constant byte address 0x4 - core index']
  #allocation1 [shape = 'u32[144,128]{1,0:T(1,128)}', space=vmem, size = 0x12000, scoped, tag = 'internal scratch']
  %s0 = inlined_call_operand.vmem [shape: f32[16,128], index: 0, kind: input, shape index: {}]
  %s1 = inlined_call_operand.vmem [shape: f32[16,128], index: 1, kind: input, shape index: {}]
  %s2 = inlined_call_operand.vmem [shape: f32[8,128], index: 2, kind: output, shape index: {}]
  %s3 = sld [smem:[#allocation0]]
  $region22: #{char_loss.1} parent=0
    _
  %s5 = ssub.s32 1, %s3
  %s6 = scalar_select 0, %s5, %s3
  // Predicated region
  $region2: #{char_loss.1} parent=0 // pred_check
    _
  $region3: #{char_loss.1} parent=0 // pred_check_branch
    %8 = sbr.rel (0) target = $region5
  $region4: #{char_loss.1} parent=0 // pred_region
    _
  $region5: #{char_loss.1} parent=0 // pred_fallthru
    _
  // Predicated region
  $region6: #{char_loss.1} parent=0 // pred_check
    _
  $region7: #{char_loss.1} parent=0 // pred_check_branch
    %10 = sbr.rel (0) target = $region9
  $region8: #{char_loss.1} parent=0 // pred_region
    _
  $region9: #{char_loss.1} parent=0 // pred_fallthru
    _
  %p11 = scmp.eq.s32.totalorder 0, 0
  // Predicated region
  $region10: #{char_loss.1} parent=0 // pred_check
    %p12 = pneg %p11
  $region11: #{char_loss.1} parent=0 // pred_check_branch
    %14 = sbr.rel (%p12) target = $region13
  $region12: #{char_loss.1} parent=0 // pred_region
    %15 = vst [vmem:[%s2] sm:$0xff] 0.0
  $region13: #{char_loss.1} parent=0 // pred_fallthru
    _
  %v16 = vld [vmem:[%s0] sm:$0xff]
  %v17 = vld [vmem:[%s0 + $0x8] sm:$0xff]
  %v18 = vld [vmem:[%s1] sm:$0xff]
  %v19 = vld [vmem:[%s1 + $0x8] sm:$0xff]
  %v20 = vsub.f32 %v16, %v18
  %v21 = vsub.f32 %v17, %v19
  %v22 = vmul.f32 %v20, %v20
  %v23 = vmul.f32 %v21, %v21
  %v24 = vadd.f32 %v22, 1e-06
  %v25 = vadd.f32 %v23, 1e-06
  %v26 = vrsqrt.pop %v24
  %v27 = vmul.f32 %v24, %v26
  %vm28 = vcmp.eq.f32.partialorder %v24, inf
  %v29 = vsel %vm28, %v24, %v27
  %vm30 = vcmp.eq.f32.partialorder %v24, 0.0
  %v31 = vand.u32 %v24, 2147483648
  %v32 = vsel %vm30, %v31, %v29
  %v33 = vrsqrt.pop %v25
  %v34 = vmul.f32 %v25, %v33
  %vm35 = vcmp.eq.f32.partialorder %v25, inf
  %v36 = vsel %vm35, %v25, %v34
  %vm37 = vcmp.eq.f32.partialorder %v25, 0.0
  %v38 = vand.u32 %v25, 2147483648
  %v39 = vsel %vm37, %v38, %v36
  %v40 = vadd.f32 %v32, %v39
  %v41 = vadd.f32 %v40, 0.0
  %v42 = vld [vmem:[%s2] sm:$0xff]
  %v43 = vadd.f32 %v42, %v41
  %44 = vst [vmem:[%s2] sm:$0xff] %v43
  // Predicated region
  $region14: #{char_loss.1} parent=0 // pred_check
    _
  $region15: #{char_loss.1} parent=0 // pred_check_branch
    %46 = sbr.rel (0) target = $region17
  $region16: #{char_loss.1} parent=0 // pred_region
    _
  $region17: #{char_loss.1} parent=0 // pred_fallthru
    _
  // Predicated region
  $region18: #{char_loss.1} parent=0 // pred_check
    _
  $region19: #{char_loss.1} parent=0 // pred_check_branch
    %48 = sbr.rel (0) target = $region21
  $region20: #{char_loss.1} parent=0 // pred_region
    _
  $region21: #{char_loss.1} parent=0 // pred_fallthru
    _

</llo_original>
